<compile_context>
chip_gen: v6e
topology: v6e:2x2x1
jax: 0.10.0
libtpu: 0.0.40
codegen_flags: <defaults>
</compile_context>

<pallas_src>
import functools
import math

import jax
import jax.numpy as jnp
from jax.experimental import pallas as pl
from jax.experimental.pallas import tpu as pltpu


# ---------------------------------------------------------------------------
# Kernels
# ---------------------------------------------------------------------------

def _gates_to_state(gates, c_prev, H):
    """Shared elementwise epilogue: gates (B, 4H) f32 -> (h_new, c_new)."""
    # One full-width sigmoid + one full-width tanh over all 4H lanes (2 EUP
    # passes), then cheap static lane slices instead of 4 narrow activations.
    sig = jax.nn.sigmoid(gates)
    tnh = jnp.tanh(gates)
    i_g = sig[:, 0 * H:1 * H]
    f_g = sig[:, 1 * H:2 * H]
    o_g = sig[:, 3 * H:4 * H]
    c_hat = tnh[:, 2 * H:3 * H]

    c_new = f_g * c_prev + i_g * c_hat
    h_new = o_g * jnp.tanh(c_new)
    return h_new, c_new


def _fused_gates(emb, h, att, w_ref, b_ref):
    """gates = [emb|h|att] @ W + b via three MXU pushes on static W row-slices."""
    I = emb.shape[-1]
    H = h.shape[-1]
    gates = jnp.dot(emb, w_ref[0:I, :], preferred_element_type=jnp.float32)
    gates += jnp.dot(h, w_ref[I:I + H, :], preferred_element_type=jnp.float32)
    gates += jnp.dot(att, w_ref[I + H:I + 2 * H, :],
                     preferred_element_type=jnp.float32)
    gates += b_ref[...]
    return gates


def _lstm_cell_kernel(emb_ref, h_ref, att_ref, c_ref, w_ref, b_ref,
                      h_out_ref, c_out_ref):
    """Single-step cell on one batch tile.

    emb_ref: (Bt, I) f32     h_ref/att_ref/c_ref: (Bt, H) f32
    w_ref  : (D, 4H) f32 fused weights, rows [w; u; z], cols gate-major (i,f,c,o)
    b_ref  : (1, 4H) f32
    h_out_ref / c_out_ref: (Bt, H) f32
    """
    H = h_ref.shape[-1]
    gates = _fused_gates(emb_ref[...], h_ref[...], att_ref[...], w_ref, b_ref)
    h_new, c_new = _gates_to_state(gates, c_ref[...], H)
    h_out_ref[...] = h_new.astype(h_out_ref.dtype)
    c_out_ref[...] = c_new.astype(c_out_ref.dtype)


def _lstm_seq_kernel(emb_ref, att_ref, h0_ref, c0_ref, w_ref, b_ref,
                     h_seq_ref, h_last_ref, c_last_ref, h_scr, c_scr):
    """T-fused decode loop: grid axis 0 = timestep, h/c carried in VMEM scratch.

    emb_ref: (B, I) f32 (timestep t block)   att_ref: (B, H) f32
    h0_ref/c0_ref: (B, H) f32 initial state  w_ref: (D, 4H)  b_ref: (1, 4H)
    h_seq_ref: (B, H) block of the (T, B, H) output at step t
    h_last_ref/c_last_ref: (B, H) final state (written on the last step)
    h_scr/c_scr: (B, H) f32 VMEM scratch carrying the recurrence.
    """
    t = pl.program_id(0)
    H = h0_ref.shape[-1]

    @pl.when(t == 0)
    def _():
        h_scr[...] = h0_ref[...]
        c_scr[...] = c0_ref[...]

    h_prev = h_scr[...]
    c_prev = c_scr[...]

    gates = _fused_gates(emb_ref[...], h_prev, att_ref[...], w_ref, b_ref)
    h_new, c_new = _gates_to_state(gates, c_prev, H)

    h_scr[...] = h_new
    c_scr[...] = c_new
    h_seq_ref[...] = h_new.astype(h_seq_ref.dtype)

    @pl.when(t == pl.num_programs(0) - 1)
    def _():
        h_last_ref[...] = h_new.astype(h_last_ref.dtype)
        c_last_ref[...] = c_new.astype(c_last_ref.dtype)


# ---------------------------------------------------------------------------
# Wrappers
# ---------------------------------------------------------------------------

@functools.lru_cache(maxsize=None)
def _num_tensorcores() -> int:
    # TODO(synk): v7x exposes 2 TensorCores/chip; if the runtime does not
    # report a core count we conservatively fall back to 1 (v5e/v6e behavior).
    try:
        return int(getattr(jax.devices()[0], "num_cores", 1) or 1)
    except Exception:  # pragma: no cover
        return 1


def _pick_batch_tile(B: int) -> int:
    """Grid stays (1,) on single-TC chips; split only when it pays on v7x."""
    num_tc = _num_tensorcores()
    if num_tc >= 2 and B >= 64:
        tile = -(-B // num_tc)            # cdiv
        tile = ((tile + 7) // 8) * 8      # sublane multiple
        return min(tile, B)
    # Single launch; cap the block for very large batches to bound VMEM.
    return min(B, 512)


@jax.jit
def att2all_lstm_cell(embedded, states_h, states_c, attended, w_fused, b_fused):
    """Single-step Att2AllLSTMCell forward. Returns (h_new, c_new), f32."""
    B, I = embedded.shape
    H = states_h.shape[-1]
    D = w_fused.shape[0]
    assert D == I + 2 * H

    b_tile = _pick_batch_tile(B)
    grid = (pl.cdiv(B, b_tile),)

    h_new, c_new = pl.pallas_call(
        _lstm_cell_kernel,
        out_shape=(
            jax.ShapeDtypeStruct((B, H), jnp.float32),
            jax.ShapeDtypeStruct((B, H), jnp.float32),
        ),
        grid=grid,
        in_specs=[
            pl.BlockSpec((b_tile, I), lambda b: (b, 0)),
            pl.BlockSpec((b_tile, H), lambda b: (b, 0)),
            pl.BlockSpec((b_tile, H), lambda b: (b, 0)),
            pl.BlockSpec((b_tile, H), lambda b: (b, 0)),
            # Constant index_maps: weights/bias stay VMEM-resident across tiles.
            pl.BlockSpec((D, 4 * H), lambda b: (0, 0)),
            pl.BlockSpec((1, 4 * H), lambda b: (0, 0)),
        ],
        out_specs=(
            pl.BlockSpec((b_tile, H), lambda b: (b, 0)),
            pl.BlockSpec((b_tile, H), lambda b: (b, 0)),
        ),
        compiler_params=pltpu.CompilerParams(
            dimension_semantics=("parallel",),
        ),
    )(embedded, states_h, attended, states_c, w_fused, b_fused)

    return h_new, c_new


@jax.jit
def att2all_lstm_sequence(embedded_seq, attended_seq, h0, c0, w_fused, b_fused):
    """T timesteps of the cell fused into one pallas_call.

    embedded_seq: (T, B, I)   attended_seq: (T, B, H)   h0/c0: (B, H)
    Returns (h_seq (T, B, H), (h_T, c_T)).
    """
    T, B, I = embedded_seq.shape
    H = h0.shape[-1]
    D = w_fused.shape[0]
    assert D == I + 2 * H

    h_seq, h_last, c_last = pl.pallas_call(
        _lstm_seq_kernel,
        out_shape=(
            jax.ShapeDtypeStruct((T, B, H), jnp.float32),
            jax.ShapeDtypeStruct((B, H), jnp.float32),
            jax.ShapeDtypeStruct((B, H), jnp.float32),
        ),
        grid=(T,),
        in_specs=[
            # Per-timestep tiles, pipelined by BlockSpec.
            pl.BlockSpec((None, B, I), lambda t: (t, 0, 0)),
            pl.BlockSpec((None, B, H), lambda t: (t, 0, 0)),
            # Initial state + params: constant index_map -> VMEM-resident.
            pl.BlockSpec((B, H), lambda t: (0, 0)),
            pl.BlockSpec((B, H), lambda t: (0, 0)),
            pl.BlockSpec((D, 4 * H), lambda t: (0, 0)),
            pl.BlockSpec((1, 4 * H), lambda t: (0, 0)),
        ],
        out_specs=(
            pl.BlockSpec((None, B, H), lambda t: (t, 0, 0)),
            pl.BlockSpec((B, H), lambda t: (0, 0)),
            pl.BlockSpec((B, H), lambda t: (0, 0)),
        ),
        scratch_shapes=[
            pltpu.VMEM((B, H), jnp.float32),   # h carry
            pltpu.VMEM((B, H), jnp.float32),   # c carry
        ],
        compiler_params=pltpu.CompilerParams(
            dimension_semantics=("arbitrary",),   # recurrence: sequential axis
        ),
    )(embedded_seq, attended_seq, h0, c0, w_fused, b_fused)

    return h_seq, (h_last, c_last)


# ---------------------------------------------------------------------------
# Parameters & reference
# ---------------------------------------------------------------------------

def init_params(key, input_size, hidden_size):
    """Mirror of reset_parameters (uniform(-stdv, stdv), stdv = 1/sqrt(rows)).

    Returns:
      w_fused: (D, 4H) f32, D = input_size + 2*hidden_size. Column block
               g*H:(g+1)*H holds [w_g; u_g; z_g] stacked along rows, gate
               order (i, f, c, o).
      b_fused: (1, 4H) f32.
    """
    keys = jax.random.split(key, 16)
    stdv_w = 1.0 / math.sqrt(input_size)
    stdv_h = 1.0 / math.sqrt(hidden_size)

    cols, biases = [], []
    k = 0
    for _ in range(4):  # gate order i, f, c, o
        w = jax.random.uniform(
            keys[k], (input_size, hidden_size), jnp.float32, -stdv_w, stdv_w)
        u = jax.random.uniform(
            keys[k + 1], (hidden_size, hidden_size), jnp.float32, -stdv_h, stdv_h)
        z = jax.random.uniform(
            keys[k + 2], (hidden_size, hidden_size), jnp.float32, -stdv_h, stdv_h)
        b = jax.random.uniform(
            keys[k + 3], (hidden_size,), jnp.float32, -stdv_h, stdv_h)
        k += 4
        cols.append(jnp.concatenate([w, u, z], axis=0))  # (D, H)
        biases.append(b)

    w_fused = jnp.concatenate(cols, axis=1)              # (D, 4H) f32
    b_fused = jnp.concatenate(biases, axis=0)[None, :]   # (1, 4H) f32
    return w_fused, b_fused


def reference_cell(embedded, h, c, attended, w_fused, b_fused):
    """Pure-JAX f32 reference matching the PyTorch module."""
    H = h.shape[-1]
    x = jnp.concatenate([embedded, h, attended], axis=-1)
    gates = jnp.dot(x, w_fused, precision=jax.lax.Precision.HIGHEST) + b_fused
    i_g = jax.nn.sigmoid(gates[:, 0 * H:1 * H])
    f_g = jax.nn.sigmoid(gates[:, 1 * H:2 * H])
    c_hat = jnp.tanh(gates[:, 2 * H:3 * H])
    o_g = jax.nn.sigmoid(gates[:, 3 * H:4 * H])
    c_new = f_g * c + i_g * c_hat
    h_new = o_g * jnp.tanh(c_new)
    return h_new, c_new


# ---------------------------------------------------------------------------
# Demo / correctness check
# ---------------------------------------------------------------------------

if __name__ == "__main__":
    INPUT_SIZE = 32
    HIDDEN_SIZE = 32
    BATCH = 8
    T = 8

    key = jax.random.PRNGKey(0)
    k_p, k_e, k_h, k_c, k_a, k_es, k_as = jax.random.split(key, 7)

    w_fused, b_fused = init_params(k_p, INPUT_SIZE, HIDDEN_SIZE)

    embedded = jax.random.normal(k_e, (BATCH, INPUT_SIZE), jnp.float32)
    states_h = jax.random.normal(k_h, (BATCH, HIDDEN_SIZE), jnp.float32)
    states_c = jax.random.normal(k_c, (BATCH, HIDDEN_SIZE), jnp.float32)
    attended = jax.random.normal(k_a, (BATCH, HIDDEN_SIZE), jnp.float32)

    # --- single-step cell (matches the PyTorch module API) ------------------
    h1, c1 = att2all_lstm_cell(
        embedded, states_h, states_c, attended, w_fused, b_fused)
    jax.block_until_ready((h1, c1))

    h1_ref, c1_ref = reference_cell(
        embedded, states_h, states_c, attended, w_fused, b_fused)
    assert jnp.allclose(h1, h1_ref, atol=1e-3, rtol=1e-3)
    assert jnp.allclose(c1, c1_ref, atol=1e-3, rtol=1e-3)

    # --- T-fused decode loop (one pallas_call for all timesteps) ------------
    emb_seq = jax.random.normal(k_es, (T, BATCH, INPUT_SIZE), jnp.float32)
    att_seq = jax.random.normal(k_as, (T, BATCH, HIDDEN_SIZE), jnp.float32)

    h_seq, (h_T, c_T) = att2all_lstm_sequence(
        emb_seq, att_seq, states_h, states_c, w_fused, b_fused)
    jax.block_until_ready((h_seq, h_T, c_T))

    h_r, c_r = states_h, states_c
    h_seq_ref = []
    for t in range(T):
        h_r, c_r = reference_cell(emb_seq[t], h_r, c_r, att_seq[t],
                                  w_fused, b_fused)
        h_seq_ref.append(h_r)
    h_seq_ref = jnp.stack(h_seq_ref, axis=0)

    assert jnp.allclose(h_seq, h_seq_ref, atol=2e-3, rtol=2e-3)
    assert jnp.allclose(h_T, h_r, atol=2e-3, rtol=2e-3)
    assert jnp.allclose(c_T, c_r, atol=2e-3, rtol=2e-3)

    print("KERNEL_OK")
</pallas_src>

<mosaic_0001>
module attributes {stable_mosaic.version = 11 : i64} {
  func.func @_lstm_cell_kernel(%arg0: i32, %arg1: memref<8x32xf32, #tpu.memory_space<vmem>>, %arg2: memref<8x32xf32, #tpu.memory_space<vmem>>, %arg3: memref<8x32xf32, #tpu.memory_space<vmem>>, %arg4: memref<8x32xf32, #tpu.memory_space<vmem>>, %arg5: memref<96x128xf32, #tpu.memory_space<vmem>>, %arg6: memref<1x128xf32, #tpu.memory_space<vmem>>, %arg7: memref<8x32xf32, #tpu.memory_space<vmem>>, %arg8: memref<8x32xf32, #tpu.memory_space<vmem>>) attributes {dimension_semantics = [#tpu.dimension_semantics<parallel>], iteration_bounds = array<i64: 1>, scalar_prefetch = 0 : i64, scratch_operands = 0 : i64, tpu.core_type = #tpu.core_type<tc>, window_params = [{transform_indices = @transform_0, window_bounds = array<i64: 8, 32>}, {transform_indices = @transform_1, window_bounds = array<i64: 8, 32>}, {transform_indices = @transform_2, window_bounds = array<i64: 8, 32>}, {transform_indices = @transform_3, window_bounds = array<i64: 8, 32>}, {pipeline_mode = #tpu.pipeline_mode<synchronous>, transform_indices = @transform_4, window_bounds = array<i64: 96, 128>}, {pipeline_mode = #tpu.pipeline_mode<synchronous>, transform_indices = @transform_5, window_bounds = array<i64: 1, 128>}, {transform_indices = @transform_6, window_bounds = array<i64: 8, 32>}, {transform_indices = @transform_7, window_bounds = array<i64: 8, 32>}]} {
    %c0 = arith.constant 0 : index
    %c0_0 = arith.constant 0 : index
    %0 = vector.load %arg1[%c0, %c0_0] : memref<8x32xf32, #tpu.memory_space<vmem>>, vector<8x32xf32>
    %c0_1 = arith.constant 0 : index
    %c0_2 = arith.constant 0 : index
    %1 = vector.load %arg2[%c0_1, %c0_2] : memref<8x32xf32, #tpu.memory_space<vmem>>, vector<8x32xf32>
    %c0_3 = arith.constant 0 : index
    %c0_4 = arith.constant 0 : index
    %2 = vector.load %arg3[%c0_3, %c0_4] : memref<8x32xf32, #tpu.memory_space<vmem>>, vector<8x32xf32>
    %c0_5 = arith.constant 0 : index
    %c0_6 = arith.constant 0 : index
    %3 = vector.load %arg5[%c0_5, %c0_6] : memref<96x128xf32, #tpu.memory_space<vmem>>, vector<32x128xf32>
    %cst = arith.constant dense<0.000000e+00> : vector<8x128xf32>
    %4 = tpu.matmul %0, %3, %cst {dimension_numbers = #tpu.dot_dimension_numbers<[1], [0], [0], [1], [0, 0, 1, 1], [], []>} : vector<8x32xf32>, vector<32x128xf32>, vector<8x128xf32> -> vector<8x128xf32>
    %c32 = arith.constant 32 : index
    %c0_7 = arith.constant 0 : index
    %5 = vector.load %arg5[%c32, %c0_7] : memref<96x128xf32, #tpu.memory_space<vmem>>, vector<32x128xf32>
    %cst_8 = arith.constant dense<0.000000e+00> : vector<8x128xf32>
    %6 = tpu.matmul %1, %5, %cst_8 {dimension_numbers = #tpu.dot_dimension_numbers<[1], [0], [0], [1], [0, 0, 1, 1], [], []>} : vector<8x32xf32>, vector<32x128xf32>, vector<8x128xf32> -> vector<8x128xf32>
    %7 = arith.addf %4, %6 : vector<8x128xf32>
    %c64 = arith.constant 64 : index
    %c0_9 = arith.constant 0 : index
    %8 = vector.load %arg5[%c64, %c0_9] : memref<96x128xf32, #tpu.memory_space<vmem>>, vector<32x128xf32>
    %cst_10 = arith.constant dense<0.000000e+00> : vector<8x128xf32>
    %9 = tpu.matmul %2, %8, %cst_10 {dimension_numbers = #tpu.dot_dimension_numbers<[1], [0], [0], [1], [0, 0, 1, 1], [], []>} : vector<8x32xf32>, vector<32x128xf32>, vector<8x128xf32> -> vector<8x128xf32>
    %10 = arith.addf %7, %9 : vector<8x128xf32>
    %c0_11 = arith.constant 0 : index
    %c0_12 = arith.constant 0 : index
    %11 = vector.load %arg6[%c0_11, %c0_12] : memref<1x128xf32, #tpu.memory_space<vmem>>, vector<1x128xf32>
    %12 = vector.broadcast %11 : vector<1x128xf32> to vector<8x128xf32>
    %13 = arith.addf %10, %12 : vector<8x128xf32>
    %c0_13 = arith.constant 0 : index
    %c0_14 = arith.constant 0 : index
    %14 = vector.load %arg4[%c0_13, %c0_14] : memref<8x32xf32, #tpu.memory_space<vmem>>, vector<8x32xf32>
    %15 = arith.negf %13 : vector<8x128xf32>
    %16 = math.exp %15 : vector<8x128xf32>
    %cst_15 = arith.constant 1.000000e+00 : f32
    %17 = vector.broadcast %cst_15 : f32 to vector<8x128xf32>
    %18 = arith.addf %17, %16 : vector<8x128xf32>
    %19 = arith.divf %17, %18 : vector<8x128xf32>
    %20 = math.tanh %13 : vector<8x128xf32>
    %21 = vector.extract_strided_slice %19 {offsets = [0, 0], sizes = [8, 32], strides = [1, 1]} : vector<8x128xf32> to vector<8x32xf32>
    %22 = vector.extract_strided_slice %19 {offsets = [0, 32], sizes = [8, 32], strides = [1, 1]} : vector<8x128xf32> to vector<8x32xf32>
    %23 = vector.extract_strided_slice %19 {offsets = [0, 96], sizes = [8, 32], strides = [1, 1]} : vector<8x128xf32> to vector<8x32xf32>
    %24 = vector.extract_strided_slice %20 {offsets = [0, 64], sizes = [8, 32], strides = [1, 1]} : vector<8x128xf32> to vector<8x32xf32>
    %25 = arith.mulf %22, %14 : vector<8x32xf32>
    %26 = arith.mulf %21, %24 : vector<8x32xf32>
    %27 = arith.addf %25, %26 : vector<8x32xf32>
    %28 = math.tanh %27 : vector<8x32xf32>
    %29 = arith.mulf %23, %28 : vector<8x32xf32>
    %c0_16 = arith.constant 0 : index
    %c0_17 = arith.constant 0 : index
    %30 = vector.load %arg7[%c0_16, %c0_17] : memref<8x32xf32, #tpu.memory_space<vmem>>, vector<8x32xf32>
    tpu.vector_store %arg7[%c0_16, %c0_17], %29 {strides = array<i32>} : memref<8x32xf32, #tpu.memory_space<vmem>>, vector<8x32xf32>,
    %c0_18 = arith.constant 0 : index
    %c0_19 = arith.constant 0 : index
    %31 = vector.load %arg8[%c0_18, %c0_19] : memref<8x32xf32, #tpu.memory_space<vmem>>, vector<8x32xf32>
    tpu.vector_store %arg8[%c0_18, %c0_19], %27 {strides = array<i32>} : memref<8x32xf32, #tpu.memory_space<vmem>>, vector<8x32xf32>,
    return
  }
  func.func @transform_0(%arg0: i32) -> (i32, i32) {
    %c0_i32 = arith.constant 0 : i32
    %c0_i32_0 = arith.constant 0 : i32
    return %arg0, %c0_i32 : i32, i32
  }
  func.func @transform_1(%arg0: i32) -> (i32, i32) {
    %c0_i32 = arith.constant 0 : i32
    %c0_i32_0 = arith.constant 0 : i32
    return %arg0, %c0_i32 : i32, i32
  }
  func.func @transform_2(%arg0: i32) -> (i32, i32) {
    %c0_i32 = arith.constant 0 : i32
    %c0_i32_0 = arith.constant 0 : i32
    return %arg0, %c0_i32 : i32, i32
  }
  func.func @transform_3(%arg0: i32) -> (i32, i32) {
    %c0_i32 = arith.constant 0 : i32
    %c0_i32_0 = arith.constant 0 : i32
    return %arg0, %c0_i32 : i32, i32
  }
  func.func @transform_4(%arg0: i32) -> (i32, i32) {
    %c0_i32 = arith.constant 0 : i32
    %c0_i32_0 = arith.constant 0 : i32
    %c0_i32_1 = arith.constant 0 : i32
    return %c0_i32, %c0_i32_0 : i32, i32
  }
  func.func @transform_5(%arg0: i32) -> (i32, i32) {
    %c0_i32 = arith.constant 0 : i32
    %c0_i32_0 = arith.constant 0 : i32
    %c0_i32_1 = arith.constant 0 : i32
    return %c0_i32, %c0_i32_0 : i32, i32
  }
  func.func @transform_6(%arg0: i32) -> (i32, i32) {
    %c0_i32 = arith.constant 0 : i32
    %c0_i32_0 = arith.constant 0 : i32
    return %arg0, %c0_i32 : i32, i32
  }
  func.func @transform_7(%arg0: i32) -> (i32, i32) {
    %c0_i32 = arith.constant 0 : i32
    %c0_i32_0 = arith.constant 0 : i32
    return %arg0, %c0_i32 : i32, i32
  }
}

</mosaic_0001>

<llo_original>
// kernel: att2all_lstm_cell.1
$region0: #{att2all_lstm_cell.1}
  #allocation0 [shape = 'u32[]', space=smem, size = 0x4, offset = 0x4, fixed_abs, tag = 'smem constant byte address 0x4 - core index']
  #allocation1 [shape = 'u32[144,128]{1,0:T(1,128)}', space=vmem, size = 0x12000, scoped, tag = 'internal scratch']
  %s0 = inlined_call_operand.hbm [shape: f32[8,32], index: 0, kind: input, shape index: {}]
  %s1 = inlined_call_operand.hbm [shape: f32[8,32], index: 1, kind: input, shape index: {}]
  %s2 = inlined_call_operand.hbm [shape: f32[8,32], index: 2, kind: input, shape index: {}]
  %s3 = inlined_call_operand.hbm [shape: f32[8,32], index: 3, kind: input, shape index: {}]
  %s4 = inlined_call_operand.hbm [shape: f32[96,128], index: 4, kind: input, shape index: {}]
  %s5 = inlined_call_operand.vmem [shape: f32[1,128], index: 5, kind: input, shape index: {}]
  %s6 = inlined_call_operand.hbm [shape: f32[8,32], index: 6, kind: output, shape index: {0}]
  %s7 = inlined_call_operand.hbm [shape: f32[8,32], index: 7, kind: output, shape index: {1}]
  %8 = xla_tuple %s6, %s7
  %s9 = sld [smem:[#allocation0]]
  $region62: #{att2all_lstm_cell.1} parent=0
    _
  %s11 = ssub.s32 1, %s9
  %s12 = scalar_select 0, %s11, %s9
  $region1: #{att2all_lstm_cell.1} parent=0
    #allocation2 [shape = 'u8[4096]{0}', space=vmem, size = 0x1000, scoped, tag = 'input window, operand 0, single buffered']
    #allocation3 [shape = 's32[1]{0}', space=sflag, size = 0x4, scoped, tag = 'scoped memory for att2all_lstm_cell.1']
    #allocation4 [shape = 's32[1]{0}', space=sflag, size = 0x4, scoped, tag = 'scoped memory for att2all_lstm_cell.1']
    #allocation5 [shape = 'u8[4096]{0}', space=vmem, size = 0x1000, scoped, tag = 'input window, operand 1, single buffered']
    #allocation6 [shape = 's32[1]{0}', space=sflag, size = 0x4, scoped, tag = 'scoped memory for att2all_lstm_cell.1']
    #allocation7 [shape = 'u8[4096]{0}', space=vmem, size = 0x1000, scoped, tag = 'input window, operand 2, single buffered']
    #allocation8 [shape = 'u8[4096]{0}', space=vmem, size = 0x1000, scoped, tag = 'input window, operand 3, single buffered']
    #allocation9 [shape = 's32[1]{0}', space=sflag, size = 0x4, scoped, tag = 'scoped memory for att2all_lstm_cell.1']
    #allocation10 [shape = 'u8[49152]{0}', space=vmem, size = 0xc000, scoped, tag = 'input window, operand 4, single buffered']
    #allocation11 [shape = 'u8[4096]{0}', space=vmem, size = 0x1000, scoped, tag = 'output window, operand 0, single buffered']
    #allocation12 [shape = 'u8[4096]{0}', space=vmem, size = 0x1000, scoped, tag = 'output window, operand 1, single buffered']
    #allocation13 [shape = 's32[1]{0}', space=sflag, size = 0x4, scoped, tag = 'scoped memory for att2all_lstm_cell.1']
    %13 = vsyncpa [#allocation3], 0
    %14 = vsyncpa [#allocation6], 0
    %15 = vsyncpa [#allocation9], 0
    %16 = vsyncpa [#allocation4], 0
    %17 = vsyncpa [#allocation13], 0
    // Predicated region
    $region2: #{att2all_lstm_cell.1} parent=1 // pred_check
      _
    $region3: #{att2all_lstm_cell.1} parent=1 // pred_check_branch
      %19 = sbr.rel (0) target = $region5
    $region4: #{att2all_lstm_cell.1} parent=1 // pred_region
      %s21 = ssub.s32 128, 128
      %22 = vsyncadd [#allocation3], %s21
      %s24 = sshll.u32 [#allocation2], 4
      %s25 = int_to_ptr.vmem [resolvable:$true] %s24
      %27 = dma.hbm_to_vmem [thread:$0]  %s0, 128, %s25, [#allocation3]
    $region5: #{att2all_lstm_cell.1} parent=1 // pred_fallthru
      _
    // Predicated region
    $region6: #{att2all_lstm_cell.1} parent=1 // pred_check
      _
    $region7: #{att2all_lstm_cell.1} parent=1 // pred_check_branch
      %29 = sbr.rel (0) target = $region9
    $region8: #{att2all_lstm_cell.1} parent=1 // pred_region
      %s31 = ssub.s32 128, 128
      %32 = vsyncadd [#allocation6], %s31
      %s34 = sshll.u32 [#allocation5], 4
      %s35 = int_to_ptr.vmem [resolvable:$true] %s34
      %37 = dma.hbm_to_vmem [thread:$0]  %s1, 128, %s35, [#allocation6]
    $region9: #{att2all_lstm_cell.1} parent=1 // pred_fallthru
      _
    // Predicated region
    $region10: #{att2all_lstm_cell.1} parent=1 // pred_check
      _
    $region11: #{att2all_lstm_cell.1} parent=1 // pred_check_branch
      %39 = sbr.rel (0) target = $region13
    $region12: #{att2all_lstm_cell.1} parent=1 // pred_region
      %s41 = ssub.s32 128, 128
      %42 = vsyncadd [#allocation6], %s41
      %s44 = sshll.u32 [#allocation7], 4
      %s45 = int_to_ptr.vmem [resolvable:$true] %s44
      %47 = dma.hbm_to_vmem [thread:$0]  %s2, 128, %s45, [#allocation6]
    $region13: #{att2all_lstm_cell.1} parent=1 // pred_fallthru
      _
    // Predicated region
    $region14: #{att2all_lstm_cell.1} parent=1 // pred_check
      _
    $region15: #{att2all_lstm_cell.1} parent=1 // pred_check_branch
      %49 = sbr.rel (0) target = $region17
    $region16: #{att2all_lstm_cell.1} parent=1 // pred_region
      %s51 = ssub.s32 128, 128
      %52 = vsyncadd [#allocation9], %s51
      %s54 = sshll.u32 [#allocation8], 4
      %s55 = int_to_ptr.vmem [resolvable:$true] %s54
      %57 = dma.hbm_to_vmem [thread:$0]  %s3, 128, %s55, [#allocation9]
    $region17: #{att2all_lstm_cell.1} parent=1 // pred_fallthru
      _
    // Predicated region
    $region18: #{att2all_lstm_cell.1} parent=1 // pred_check
      _
    $region19: #{att2all_lstm_cell.1} parent=1 // pred_check_branch
      %59 = sbr.rel (0) target = $region21
    $region20: #{att2all_lstm_cell.1} parent=1 // pred_region
      %s61 = ssub.s32 1536, 1536
      %62 = vsyncadd [#allocation9], %s61
      %s63 = sshll.u32 [#allocation10], 4
      %s64 = int_to_ptr.vmem [resolvable:$true] %s63
      %69 = dma.hbm_to_vmem [thread:$0]  %s4, 1536, %s64, [#allocation9], 128, 128, 8
    $region21: #{att2all_lstm_cell.1} parent=1 // pred_fallthru
      _
    // Predicated region
    $region22: #{att2all_lstm_cell.1} parent=1 // pred_check
      _
    $region23: #{att2all_lstm_cell.1} parent=1 // pred_check_branch
      %71 = sbr.rel (0) target = $region25
    $region24: #{att2all_lstm_cell.1} parent=1 // pred_region
      _
    $region25: #{att2all_lstm_cell.1} parent=1 // pred_fallthru
      _
    // Predicated region
    $region26: #{att2all_lstm_cell.1} parent=1 // pred_check
      _
    $region27: #{att2all_lstm_cell.1} parent=1 // pred_check_branch
      %73 = sbr.rel (0) target = $region29
    $region28: #{att2all_lstm_cell.1} parent=1 // pred_region
      %74 = dma.done [#allocation3], 128
    $region29: #{att2all_lstm_cell.1} parent=1 // pred_fallthru
      _
    // Predicated region
    $region30: #{att2all_lstm_cell.1} parent=1 // pred_check
      _
    $region31: #{att2all_lstm_cell.1} parent=1 // pred_check_branch
      %76 = sbr.rel (0) target = $region33
    $region32: #{att2all_lstm_cell.1} parent=1 // pred_region
      %77 = dma.done [#allocation6], 128
    $region33: #{att2all_lstm_cell.1} parent=1 // pred_fallthru
      _
    // Predicated region
    $region34: #{att2all_lstm_cell.1} parent=1 // pred_check
      _
    $region35: #{att2all_lstm_cell.1} parent=1 // pred_check_branch
      %79 = sbr.rel (0) target = $region37
    $region36: #{att2all_lstm_cell.1} parent=1 // pred_region
      %80 = dma.done [#allocation6], 128
    $region37: #{att2all_lstm_cell.1} parent=1 // pred_fallthru
      _
    // Predicated region
    $region38: #{att2all_lstm_cell.1} parent=1 // pred_check
      _
    $region39: #{att2all_lstm_cell.1} parent=1 // pred_check_branch
      %82 = sbr.rel (0) target = $region41
    $region40: #{att2all_lstm_cell.1} parent=1 // pred_region
      %83 = dma.done [#allocation9], 128
    $region41: #{att2all_lstm_cell.1} parent=1 // pred_fallthru
      _
    // Predicated region
    $region42: #{att2all_lstm_cell.1} parent=1 // pred_check
      _
    $region43: #{att2all_lstm_cell.1} parent=1 // pred_check_branch
      %85 = sbr.rel (0) target = $region45
    $region44: #{att2all_lstm_cell.1} parent=1 // pred_region
      %86 = dma.done [#allocation9], 1536
    $region45: #{att2all_lstm_cell.1} parent=1 // pred_fallthru
      _
    %v87 = vld [vmem:[#allocation2] sm:$0xff]
    %v88 = vld [vmem:[#allocation5] sm:$0xff]
    %v89 = vld [vmem:[#allocation7] sm:$0xff]
    %v90 = vld [vmem:[#allocation10] sm:$0xff]
    %v91 = vld [vmem:[#allocation10 + $0x8] sm:$0xff]
    %v92 = vld [vmem:[#allocation10 + $0x10] sm:$0xff]
    %v93 = vld [vmem:[#allocation10 + $0x18] sm:$0xff]
    %v94 = vld [vmem:[#allocation10 + $0x20] sm:$0xff]
    %v95 = vld [vmem:[#allocation10 + $0x28] sm:$0xff]
    %v96 = vld [vmem:[#allocation10 + $0x30] sm:$0xff]
    %v97 = vld [vmem:[#allocation10 + $0x38] sm:$0xff]
    %vm98 = vcmask 261120
    %v100 = vsel %vm98, %v88, 0
    %102 = vmatprep.subr.mxu0 0.0
    %103 = vmatpush1.msra.mxu0 0.0
    %104 = vmatprep.subr.mxu0 0.0
    %105 = vmatpush1.msra.mxu0 0.0
    %106 = vmatprep.subr.mxu0 0.0
    %107 = vmatpush1.msra.mxu0 0.0
    %108 = vmatprep.subr.mxu0 0.0
    %109 = vmatpush1.msra.mxu0 0.0
    %110 = vmatprep.subr.mxu0 0.0
    %111 = vmatpush1.msra.mxu0 0.0
    %112 = vmatprep.subr.mxu0 0.0
    %113 = vmatpush1.msra.mxu0 0.0
    %114 = vmatprep.subr.mxu0 0.0
    %115 = vmatpush1.msra.mxu0 0.0
    %116 = vmatprep.subr.mxu0 0.0
    %117 = vmatpush1.msra.mxu0 0.0
    %118 = vmatprep.subr.mxu0 0.0
    %119 = vmatpush1.msra.mxu0 0.0
    %120 = vmatprep.subr.mxu0 0.0
    %121 = vmatpush1.msra.mxu0 0.0
    %122 = vmatprep.subr.mxu0 0.0
    %123 = vmatpush1.msra.mxu0 0.0
    %124 = vmatprep.subr.mxu0 0.0
    %125 = vmatpush1.msra.mxu0 0.0
    %126 = vmatprep.subr.mxu0 0.0
    %127 = vmatpush1.msra.mxu0 %v97
    %128 = vmatprep.subr.mxu0 0.0
    %129 = vmatpush1.msra.mxu0 %v96
    %130 = vmatprep.subr.mxu0 0.0
    %131 = vmatpush1.msra.mxu0 %v95
    %132 = vmatprep.subr.mxu0 0.0
    %133 = vmatpush1.msra.mxu0 %v94
    %134 = vmatprep.subr.mxu0 0.0
    %135 = vmatpush2.msra.mxu0 0.0
    %136 = vmatprep.subr.mxu0 0.0
    %137 = vmatpush2.msra.mxu0 0.0
    %138 = vmatprep.subr.mxu0 0.0
    %139 = vmatpush2.msra.mxu0 0.0
    %140 = vmatprep.subr.mxu0 0.0
    %141 = vmatpush2.msra.mxu0 0.0
    %142 = vmatprep.subr.mxu0 0.0
    %143 = vmatpush2.msra.mxu0 0.0
    %144 = vmatprep.subr.mxu0 0.0
    %145 = vmatpush2.msra.mxu0 0.0
    %146 = vmatprep.subr.mxu0 0.0
    %147 = vmatpush2.msra.mxu0 0.0
    %148 = vmatprep.subr.mxu0 0.0
    %149 = vmatpush2.msra.mxu0 0.0
    %150 = vmatprep.subr.mxu0 0.0
    %151 = vmatpush2.msra.mxu0 0.0
    %152 = vmatprep.subr.mxu0 0.0
    %153 = vmatpush2.msra.mxu0 0.0
    %154 = vmatprep.subr.mxu0 0.0
    %155 = vmatpush2.msra.mxu0 0.0
    %156 = vmatprep.subr.mxu0 0.0
    %157 = vmatpush2.msra.mxu0 0.0
    %158 = vmatprep.subr.mxu0 0.0
    %159 = vmatpush2.msra.mxu0 0.0
    %160 = vmatprep.subr.mxu0 0.0
    %161 = vmatpush2.msra.mxu0 0.0
    %162 = vmatprep.subr.mxu0 0.0
    %163 = vmatpush2.msra.mxu0 0.0
    %164 = vmatprep.subr.mxu0 0.0
    %165 = vmatpush2.msra.mxu0 0.0
    %166 = vmatprep.mubr.f32.mxu0 0.0
    %167 = vmatmul.mubr.f32.gmra.mxu0 %v100
    %v168 = vpop.f32.mrf.mxu0
    %v169 = vadd.f32 0.0, %v168
    %v170 = vpop.f32.mrf.mxu0
    %171 = vdwg.mxu0
    %v173 = vsel %vm98, %v87, 0
    %175 = vmatprep.subr.mxu0 0.0
    %176 = vmatpush1.msra.mxu0 0.0
    %177 = vmatprep.subr.mxu0 0.0
    %178 = vmatpush1.msra.mxu0 0.0
    %179 = vmatprep.subr.mxu0 0.0
    %180 = vmatpush1.msra.mxu0 0.0
    %181 = vmatprep.subr.mxu0 0.0
    %182 = vmatpush1.msra.mxu0 0.0
    %183 = vmatprep.subr.mxu0 0.0
    %184 = vmatpush1.msra.mxu0 0.0
    %185 = vmatprep.subr.mxu0 0.0
    %186 = vmatpush1.msra.mxu0 0.0
    %187 = vmatprep.subr.mxu0 0.0
    %188 = vmatpush1.msra.mxu0 0.0
    %189 = vmatprep.subr.mxu0 0.0
    %190 = vmatpush1.msra.mxu0 0.0
    %191 = vmatprep.subr.mxu0 0.0
    %192 = vmatpush1.msra.mxu0 0.0
    %193 = vmatprep.subr.mxu0 0.0
    %194 = vmatpush1.msra.mxu0 0.0
    %195 = vmatprep.subr.mxu0 0.0
    %196 = vmatpush1.msra.mxu0 0.0
    %197 = vmatprep.subr.mxu0 0.0
    %198 = vmatpush1.msra.mxu0 0.0
    %199 = vmatprep.subr.mxu0 0.0
    %200 = vmatpush1.msra.mxu0 %v93
    %201 = vmatprep.subr.mxu0 0.0
    %202 = vmatpush1.msra.mxu0 %v92
    %203 = vmatprep.subr.mxu0 0.0
    %204 = vmatpush1.msra.mxu0 %v91
    %205 = vmatprep.subr.mxu0 0.0
    %206 = vmatpush1.msra.mxu0 %v90
    %207 = vmatprep.subr.mxu0 0.0
    %208 = vmatpush2.msra.mxu0 0.0
    %209 = vmatprep.subr.mxu0 0.0
    %210 = vmatpush2.msra.mxu0 0.0
    %211 = vmatprep.subr.mxu0 0.0
    %212 = vmatpush2.msra.mxu0 0.0
    %213 = vmatprep.subr.mxu0 0.0
    %214 = vmatpush2.msra.mxu0 0.0
    %215 = vmatprep.subr.mxu0 0.0
    %216 = vmatpush2.msra.mxu0 0.0
    %217 = vmatprep.subr.mxu0 0.0
    %218 = vmatpush2.msra.mxu0 0.0
    %219 = vmatprep.subr.mxu0 0.0
    %220 = vmatpush2.msra.mxu0 0.0
    %221 = vmatprep.subr.mxu0 0.0
    %222 = vmatpush2.msra.mxu0 0.0
    %223 = vmatprep.subr.mxu0 0.0
    %224 = vmatpush2.msra.mxu0 0.0
    %225 = vmatprep.subr.mxu0 0.0
    %226 = vmatpush2.msra.mxu0 0.0
    %227 = vmatprep.subr.mxu0 0.0
    %228 = vmatpush2.msra.mxu0 0.0
    %229 = vmatprep.subr.mxu0 0.0
    %230 = vmatpush2.msra.mxu0 0.0
    %231 = vmatprep.subr.mxu0 0.0
    %232 = vmatpush2.msra.mxu0 0.0
    %233 = vmatprep.subr.mxu0 0.0
    %234 = vmatpush2.msra.mxu0 0.0
    %235 = vmatprep.subr.mxu0 0.0
    %236 = vmatpush2.msra.mxu0 0.0
    %237 = vmatprep.subr.mxu0 0.0
    %238 = vmatpush2.msra.mxu0 0.0
    %239 = vmatprep.mubr.f32.mxu0 0.0
    %240 = vmatmul.mubr.f32.gmra.mxu0 %v173
    %v241 = vpop.f32.mrf.mxu0
    %v242 = vadd.f32 %v169, %v241
    %v243 = vpop.f32.mrf.mxu0
    %244 = vdwg.mxu0
    %v245 = vld [vmem:[#allocation10 + $0x40] sm:$0xff]
    %v246 = vld [vmem:[#allocation10 + $0x48] sm:$0xff]
    %v247 = vld [vmem:[#allocation10 + $0x50] sm:$0xff]
    %v248 = vld [vmem:[#allocation10 + $0x58] sm:$0xff]
    %v250 = vsel %vm98, %v89, 0
    %252 = vmatprep.subr.mxu0 0.0
    %253 = vmatpush1.msra.mxu0 0.0
    %254 = vmatprep.subr.mxu0 0.0
    %255 = vmatpush1.msra.mxu0 0.0
    %256 = vmatprep.subr.mxu0 0.0
    %257 = vmatpush1.msra.mxu0 0.0
    %258 = vmatprep.subr.mxu0 0.0
    %259 = vmatpush1.msra.mxu0 0.0
    %260 = vmatprep.subr.mxu0 0.0
    %261 = vmatpush1.msra.mxu0 0.0
    %262 = vmatprep.subr.mxu0 0.0
    %263 = vmatpush1.msra.mxu0 0.0
    %264 = vmatprep.subr.mxu0 0.0
    %265 = vmatpush1.msra.mxu0 0.0
    %266 = vmatprep.subr.mxu0 0.0
    %267 = vmatpush1.msra.mxu0 0.0
    %268 = vmatprep.subr.mxu0 0.0
    %269 = vmatpush1.msra.mxu0 0.0
    %270 = vmatprep.subr.mxu0 0.0
    %271 = vmatpush1.msra.mxu0 0.0
    %272 = vmatprep.subr.mxu0 0.0
    %273 = vmatpush1.msra.mxu0 0.0
    %274 = vmatprep.subr.mxu0 0.0
    %275 = vmatpush1.msra.mxu0 0.0
    %276 = vmatprep.subr.mxu0 0.0
    %277 = vmatpush1.msra.mxu0 %v248
    %278 = vmatprep.subr.mxu0 0.0
    %279 = vmatpush1.msra.mxu0 %v247
    %280 = vmatprep.subr.mxu0 0.0
    %281 = vmatpush1.msra.mxu0 %v246
    %282 = vmatprep.subr.mxu0 0.0
    %283 = vmatpush1.msra.mxu0 %v245
    %284 = vmatprep.subr.mxu0 0.0
    %285 = vmatpush2.msra.mxu0 0.0
    %286 = vmatprep.subr.mxu0 0.0
    %287 = vmatpush2.msra.mxu0 0.0
    %288 = vmatprep.subr.mxu0 0.0
    %289 = vmatpush2.msra.mxu0 0.0
    %290 = vmatprep.subr.mxu0 0.0
    %291 = vmatpush2.msra.mxu0 0.0
    %292 = vmatprep.subr.mxu0 0.0
    %293 = vmatpush2.msra.mxu0 0.0
    %294 = vmatprep.subr.mxu0 0.0
    %295 = vmatpush2.msra.mxu0 0.0
    %296 = vmatprep.subr.mxu0 0.0
    %297 = vmatpush2.msra.mxu0 0.0
    %298 = vmatprep.subr.mxu0 0.0
    %299 = vmatpush2.msra.mxu0 0.0
    %300 = vmatprep.subr.mxu0 0.0
    %301 = vmatpush2.msra.mxu0 0.0
    %302 = vmatprep.subr.mxu0 0.0
    %303 = vmatpush2.msra.mxu0 0.0
    %304 = vmatprep.subr.mxu0 0.0
    %305 = vmatpush2.msra.mxu0 0.0
    %306 = vmatprep.subr.mxu0 0.0
    %307 = vmatpush2.msra.mxu0 0.0
    %308 = vmatprep.subr.mxu0 0.0
    %309 = vmatpush2.msra.mxu0 0.0
    %310 = vmatprep.subr.mxu0 0.0
    %311 = vmatpush2.msra.mxu0 0.0
    %312 = vmatprep.subr.mxu0 0.0
    %313 = vmatpush2.msra.mxu0 0.0
    %314 = vmatprep.subr.mxu0 0.0
    %315 = vmatpush2.msra.mxu0 0.0
    %316 = vmatprep.mubr.f32.mxu0 0.0
    %317 = vmatmul.mubr.f32.gmra.mxu0 %v250
    %v318 = vpop.f32.mrf.mxu0
    %v319 = vadd.f32 0.0, %v318
    %v320 = vpop.f32.mrf.mxu0
    %321 = vdwg.mxu0
    %v322 = vadd.f32 %v242, %v319
    %v323 = vld [vmem:[%s5] sm:$0x1]
    %v325 = vlaneseq
    %v326 = vshrl.u32 %v325, 7
    %v327 = vsub.s32 0, %v326
    %v328 = vrot.slane %v323, %v327
    %v330 = vadd.f32 %v322, %v328
    %v331 = vld [vmem:[#allocation8] sm:$0xff]
    %v332 = vxor.u32 %v330, 2147483648
    %v333 = vmul.f32 %v332, 1.442695
    %v334 = vpow.pop %v333
    %v335 = vadd.f32 %v334, 1.0
    %v336 = vrcp.pop %v335
    %v337 = vmul.f32 1.0, %v336
    %v338 = vtanh.pop %v330
    %340 = vrot.lane.b32.xlu0 %v331, 32
    %v341 = vpop.permute.xlu0 %340
    %v343 = vmul.f32 %v337, %v341
    %345 = vrot.lane.b32.xlu0 %v338, 64
    %v346 = vpop.permute.xlu0 %345
    %v348 = vmul.f32 %v337, %v346
    %350 = vrot.lane.b32.xlu0 %v348, 32
    %v351 = vpop.permute.xlu0 %350
    %v353 = vadd.f32 %v343, %v351
    %v354 = vtanh.pop %v353
    %356 = vrot.lane.b32.xlu0 %v354, 64
    %v357 = vpop.permute.xlu0 %356
    %v359 = vmul.f32 %v337, %v357
    %361 = vrot.lane.b32.xlu0 %v359, 32
    %v362 = vpop.permute.xlu0 %361
    %364 = vst.msk [vmem:[#allocation11] sm:$0xff] %vm98, %v362
    %366 = vrot.lane.b32.xlu0 %v353, 96
    %v367 = vpop.permute.xlu0 %366
    %369 = vst.msk [vmem:[#allocation12] sm:$0xff] %vm98, %v367
    // Predicated region
    $region46: #{att2all_lstm_cell.1} parent=1 // pred_check
      _
    $region47: #{att2all_lstm_cell.1} parent=1 // pred_check_branch
      %371 = sbr.rel (0) target = $region49
    $region48: #{att2all_lstm_cell.1} parent=1 // pred_region
      %s373 = ssub.s32 128, 128
      %374 = vsyncadd [#allocation4], %s373
      %s376 = sshll.u32 [#allocation11], 4
      %s377 = int_to_ptr.vmem [resolvable:$true] %s376
      %379 = dma.vmem_to_hbm [thread:$0]  %s377, 128, %s6, [#allocation4]
    $region49: #{att2all_lstm_cell.1} parent=1 // pred_fallthru
      _
    // Predicated region
    $region50: #{att2all_lstm_cell.1} parent=1 // pred_check
      _
    $region51: #{att2all_lstm_cell.1} parent=1 // pred_check_branch
      %381 = sbr.rel (0) target = $region53
    $region52: #{att2all_lstm_cell.1} parent=1 // pred_region
      %s383 = ssub.s32 128, 128
      %384 = vsyncadd [#allocation13], %s383
      %s386 = sshll.u32 [#allocation12], 4
      %s387 = int_to_ptr.vmem [resolvable:$true] %s386
      %389 = dma.vmem_to_hbm [thread:$0]  %s387, 128, %s7, [#allocation13]
    $region53: #{att2all_lstm_cell.1} parent=1 // pred_fallthru
      _
    // Predicated region
    $region54: #{att2all_lstm_cell.1} parent=1 // pred_check
      _
    $region55: #{att2all_lstm_cell.1} parent=1 // pred_check_branch
      %391 = sbr.rel (0) target = $region57
    $region56: #{att2all_lstm_cell.1} parent=1 // pred_region
      %392 = dma.done [#allocation4], 128
    $region57: #{att2all_lstm_cell.1} parent=1 // pred_fallthru
      _
    // Predicated region
    $region58: #{att2all_lstm_cell.1} parent=1 // pred_check
      _
    $region59: #{att2all_lstm_cell.1} parent=1 // pred_check_branch
      %394 = sbr.rel (0) target = $region61
    $region60: #{att2all_lstm_cell.1} parent=1 // pred_region
      %395 = dma.done [#allocation13], 128
    $region61: #{att2all_lstm_cell.1} parent=1 // pred_fallthru
      _
    %396 = vsyncpa [#allocation3], 1
    %397 = vsyncpa [#allocation6], 1
    %398 = vsyncpa [#allocation9], 1
    %399 = vsyncpa [#allocation4], 1
    %400 = vsyncpa [#allocation13], 1

</llo_original>
